<compile_context>
chip_gen: v7x
topology: tpu7x:2x2x1
jax: 0.10.0
libtpu: 0.0.40
codegen_flags: <defaults>
</compile_context>

<pallas_src>
import functools
import math

import jax
import jax.numpy as jnp
from jax import lax
from jax.experimental import pallas as pl
from jax.experimental.pallas import tpu as pltpu

_NEG_INF = -0.7 * float(jnp.finfo(jnp.float32).max)   # key-mask value / running-max init


def _qkv_attn_kernel(q_ref, k_ref, v_ref, o_ref, *scratch,
                     qscale, kv_len, tkv, nkv, kv_ragged, approx):
    """One (batch-head block, query tile, kv tile) grid step.

    q_ref: (HB, C, TQ)   k_ref / v_ref: (HB, C, TKV)   o_ref: (HB, C, TQ)
    scratch (only when nkv > 1): m (HB,1,TQ) f32, l (HB,1,TQ) f32, acc (HB,C,TQ) f32
    """
    q = q_ref[...]                       # (HB, C, TQ)  input dtype
    k = k_ref[...]                       # (HB, C, TKV)
    v = v_ref[...]                       # (HB, C, TKV)

    # Fold both 1/ch**0.25 scales into q (softmax is invariant to the split).
    q = q * jnp.asarray(qscale, q.dtype)

    # logits s[h, s, t] = sum_c k[h,c,s] * q[h,c,t]  (MXU, f32 accumulation).
    # (TKV, TQ) orientation keeps all softmax stats lane-dense (1, TQ).
    s = jnp.einsum('hcs,hct->hst', k, q,
                   preferred_element_type=jnp.float32)            # (HB, TKV, TQ) f32

    if kv_ragged:
        kv_off = pl.program_id(2) * tkv
        # Mask out-of-range keys in the logits (softmax correctness) ...
        kv_pos = lax.broadcasted_iota(jnp.int32, s.shape, 1) + kv_off
        s = jnp.where(kv_pos < kv_len, s, _NEG_INF)
        # ... and zero the corresponding V columns: their probabilities are 0,
        # but 0 * garbage (possibly Inf/NaN read by the ragged DMA) would
        # otherwise poison the AV accumulation of valid query columns.
        v_pos = lax.broadcasted_iota(jnp.int32, v.shape, 2) + kv_off
        v = jnp.where(v_pos < kv_len, v, 0)

    if nkv == 1:
        # Single KV tile: plain softmax with deferred normalization, no scratch.
        m = jnp.max(s, axis=1, keepdims=True)                     # (HB, 1, TQ)
        p32 = jnp.exp(s - m)                                      # f32 softmax stats
        denom = jnp.sum(p32, axis=1, keepdims=True)               # (HB, 1, TQ)
        a = jnp.einsum('hcs,hst->hct', v, p32.astype(v.dtype),
                       preferred_element_type=jnp.float32)        # (HB, C, TQ) f32
        o_ref[...] = (a * pl.reciprocal(denom, approx=approx)).astype(o_ref.dtype)
    else:
        m_ref, l_ref, acc_ref = scratch
        kv_i = pl.program_id(2)

        @pl.when(kv_i == 0)
        def _():
            m_ref[...] = jnp.full_like(m_ref, _NEG_INF)
            l_ref[...] = jnp.zeros_like(l_ref)
            acc_ref[...] = jnp.zeros_like(acc_ref)

        m_prev = m_ref[...]                                        # (HB, 1, TQ)
        m_new = jnp.maximum(m_prev, jnp.max(s, axis=1, keepdims=True))
        alpha = jnp.exp(m_prev - m_new)                            # (HB, 1, TQ)
        p32 = jnp.exp(s - m_new)                                   # (HB, TKV, TQ) f32
        l_ref[...] = alpha * l_ref[...] + jnp.sum(p32, axis=1, keepdims=True)
        pv = jnp.einsum('hcs,hst->hct', v, p32.astype(v.dtype),
                        preferred_element_type=jnp.float32)        # (HB, C, TQ) f32
        acc_ref[...] = alpha * acc_ref[...] + pv
        m_ref[...] = m_new

        @pl.when(kv_i == pl.num_programs(2) - 1)
        def _():
            o_ref[...] = (acc_ref[...] *
                          pl.reciprocal(l_ref[...], approx=approx)).astype(o_ref.dtype)


def qkv_attention_legacy(qkv, n_heads, *, tq=256, tkv=512, heads_per_block=None):
    """Pallas implementation of QKVAttentionLegacy.forward.

    :param qkv: [N, H*3*C, T] array of Qs, Ks, Vs.
    :param tq:  query-tile size (rounded down to a multiple of 128 when tiling).
    :param tkv: key/value-tile size (rounded down to a multiple of 128 when tiling).
    :param heads_per_block: heads packed per grid step (auto if None).
    :return:    [N, H*C, T] array after attention.
    """
    bs, width, length = qkv.shape
    assert width % (3 * n_heads) == 0
    ch = width // (3 * n_heads)
    B = bs * n_heads
    T = length

    # Free reshape: (N, H*3*C, T) -> (B, 3, C, T); q/k/v selected via index_map
    # (no XLA slices, no extra HBM round trip, no wrapper-side padding).
    qkv4 = qkv.reshape(B, 3, ch, T)

    # Tile sizes: full T when it fits, otherwise lane-dense multiples of 128
    # (ragged edge tiles handled by Pallas partial blocks + in-kernel masking).
    def _tile(t):
        return T if T <= t else max(128, (t // 128) * 128)

    TQ = _tile(tq)
    TKV = _tile(tkv)
    nq = pl.cdiv(T, TQ)
    nkv = pl.cdiv(T, TKV)
    kv_ragged = (nkv > 1) and (T % TKV != 0)

    # For small sequences the kernel is per-step-overhead dominated: pack a few
    # heads per grid step (the grid is a serial loop per TensorCore).
    hb = heads_per_block
    if hb is None:
        hb = 1
        if T <= 512:
            for cand in (8, 4, 2):
                if B % cand == 0:
                    hb = cand
                    break
    assert B % hb == 0, "heads_per_block must divide bs * n_heads"
    nb = B // hb

    qscale = 1.0 / math.sqrt(ch)                  # (1/ch**0.25)**2 folded into q
    approx = jnp.dtype(qkv.dtype) != jnp.dtype(jnp.float32)

    kernel = functools.partial(
        _qkv_attn_kernel, qscale=qscale, kv_len=T, tkv=TKV, nkv=nkv,
        kv_ragged=kv_ragged, approx=approx)

    # None on the size-3 axis squeezes it from the kernel refs (q/k/v selection).
    q_spec = pl.BlockSpec((hb, None, ch, TQ), lambda b, t, s: (b, 0, 0, t))
    k_spec = pl.BlockSpec((hb, None, ch, TKV), lambda b, t, s: (b, 1, 0, s))
    v_spec = pl.BlockSpec((hb, None, ch, TKV), lambda b, t, s: (b, 2, 0, s))
    o_spec = pl.BlockSpec((hb, ch, TQ), lambda b, t, s: (b, 0, t))

    if nkv == 1:
        scratch_shapes = []
    else:
        scratch_shapes = [
            pltpu.VMEM((hb, 1, TQ), jnp.float32),   # running max
            pltpu.VMEM((hb, 1, TQ), jnp.float32),   # running sum
            pltpu.VMEM((hb, ch, TQ), jnp.float32),  # unnormalized output
        ]

    # Explicit VMEM budget sized from the tiles (default scoped VMEM is only
    # 16 MiB on v5e / 32 MiB on v6e & v7x); clamp to v7x's 64 MiB physical.
    in_bytes = jnp.dtype(qkv.dtype).itemsize
    blocks = hb * ch * (TQ + 2 * TKV) * in_bytes       # q + k + v tiles
    out_b = hb * ch * TQ * in_bytes
    scratch_b = hb * (ch + 16) * TQ * 4
    temps = 2 * hb * TKV * TQ * 4                      # logits + probs (f32)
    needed = 2 * (blocks + out_b) + scratch_b + temps
    vmem_limit = int(min(max(2 * needed, 32 * 1024 * 1024), 64 * 1024 * 1024))

    out = pl.pallas_call(
        kernel,
        out_shape=jax.ShapeDtypeStruct((B, ch, T), qkv.dtype),
        grid_spec=pltpu.PrefetchScalarGridSpec(
            num_scalar_prefetch=0,
            grid=(nb, nq, nkv),
            in_specs=[q_spec, k_spec, v_spec],
            out_specs=o_spec,
            scratch_shapes=scratch_shapes,
        ),
        compiler_params=pltpu.CompilerParams(
            # batch-head and query axes are independent (each output tile written
            # once) -> megacore-parallel; KV is the online-softmax reduction axis.
            dimension_semantics=("parallel", "parallel", "arbitrary"),
            vmem_limit_bytes=vmem_limit,
        ),
    )(qkv4, qkv4, qkv4)

    return out.reshape(bs, n_heads * ch, T)


def _reference(qkv, n_heads):
    # Pure-JAX reference mirroring the PyTorch forward, for verification.
    bs, width, length = qkv.shape
    ch = width // (3 * n_heads)
    qkv_r = qkv.reshape(bs * n_heads, 3 * ch, length)
    q, k, v = qkv_r[:, :ch], qkv_r[:, ch:2 * ch], qkv_r[:, 2 * ch:]
    scale = 1.0 / math.sqrt(math.sqrt(ch))
    weight = jnp.einsum('bct,bcs->bts', q * scale, k * scale)
    weight = jax.nn.softmax(weight.astype(jnp.float32), axis=-1).astype(weight.dtype)
    a = jnp.einsum('bts,bcs->bct', weight, v)
    return a.reshape(bs, -1, length)


if __name__ == "__main__":
    N, H, C = 2, 2, 8
    key = jax.random.PRNGKey(0)
    k1, k2 = jax.random.split(key)

    # Case 1: small T -> single KV tile, heads packed per grid step.
    T1 = 16
    qkv1 = jax.random.normal(k1, (N, H * 3 * C, T1), dtype=jnp.float32)
    out1 = jax.block_until_ready(qkv_attention_legacy(qkv1, n_heads=H))
    ref1 = _reference(qkv1, n_heads=H)
    assert out1.shape == (N, H * C, T1), out1.shape
    assert jnp.allclose(out1, ref1, atol=1e-4, rtol=1e-4), "mismatch vs reference (case 1)"

    # Case 2: T not a tile multiple -> online-softmax KV tiling with ragged
    # query and key tiles handled in-kernel (no wrapper pad / output slice).
    T2 = 200
    qkv2 = jax.random.normal(k2, (N, H * 3 * C, T2), dtype=jnp.float32)
    out2 = jax.block_until_ready(
        qkv_attention_legacy(qkv2, n_heads=H, tq=128, tkv=128))
    ref2 = _reference(qkv2, n_heads=H)
    assert out2.shape == (N, H * C, T2), out2.shape
    assert jnp.allclose(out2, ref2, atol=1e-4, rtol=1e-4), "mismatch vs reference (case 2)"

    print("KERNEL_OK")
</pallas_src>

<mosaic_0001>
module attributes {stable_mosaic.version = 11 : i64} {
  func.func @_qkv_attn_kernel(%arg0: i32, %arg1: i32, %arg2: i32, %arg3: memref<4x1x8x16xf32, #tpu.memory_space<vmem>>, %arg4: memref<4x1x8x16xf32, #tpu.memory_space<vmem>>, %arg5: memref<4x1x8x16xf32, #tpu.memory_space<vmem>>, %arg6: memref<4x8x16xf32, #tpu.memory_space<vmem>>) attributes {dimension_semantics = [#tpu.dimension_semantics<parallel>, #tpu.dimension_semantics<parallel>, #tpu.dimension_semantics<arbitrary>], iteration_bounds = array<i64: 1, 1, 1>, scalar_prefetch = 0 : i64, scratch_operands = 0 : i64, tpu.core_type = #tpu.core_type<tc>, window_params = [{transform_indices = @transform_0, window_bounds = array<i64: 4, 1, 8, 16>}, {transform_indices = @transform_1, window_bounds = array<i64: 4, 1, 8, 16>}, {transform_indices = @transform_2, window_bounds = array<i64: 4, 1, 8, 16>}, {transform_indices = @transform_3, window_bounds = array<i64: 4, 8, 16>}]} {
    %c0 = arith.constant 0 : index
    %c0_0 = arith.constant 0 : index
    %c0_1 = arith.constant 0 : index
    %c0_2 = arith.constant 0 : index
    %0 = vector.load %arg3[%c0, %c0_0, %c0_1, %c0_2] : memref<4x1x8x16xf32, #tpu.memory_space<vmem>>, vector<4x1x8x16xf32>
    %1 = vector.shape_cast %0 : vector<4x1x8x16xf32> to vector<4x8x16xf32>
    %c0_3 = arith.constant 0 : index
    %c0_4 = arith.constant 0 : index
    %c0_5 = arith.constant 0 : index
    %c0_6 = arith.constant 0 : index
    %2 = vector.load %arg4[%c0_3, %c0_4, %c0_5, %c0_6] : memref<4x1x8x16xf32, #tpu.memory_space<vmem>>, vector<4x1x8x16xf32>
    %3 = vector.shape_cast %2 : vector<4x1x8x16xf32> to vector<4x8x16xf32>
    %c0_7 = arith.constant 0 : index
    %c0_8 = arith.constant 0 : index
    %c0_9 = arith.constant 0 : index
    %c0_10 = arith.constant 0 : index
    %4 = vector.load %arg5[%c0_7, %c0_8, %c0_9, %c0_10] : memref<4x1x8x16xf32, #tpu.memory_space<vmem>>, vector<4x1x8x16xf32>
    %5 = vector.shape_cast %4 : vector<4x1x8x16xf32> to vector<4x8x16xf32>
    %cst = arith.constant 0.353553385 : f32
    %6 = vector.broadcast %cst : f32 to vector<4x8x16xf32>
    %7 = arith.mulf %1, %6 : vector<4x8x16xf32>
    "tpu.trace_start"() <{level = 10 : i32, message = "hcs,hct->hst"}> : () -> ()
    %cst_11 = arith.constant dense<0.000000e+00> : vector<4x16x16xf32>
    %8 = tpu.matmul %3, %7, %cst_11 {dimension_numbers = #tpu.dot_dimension_numbers<[1], [1], [2], [2], [0, 0, 0, 2, 1, 2], [0], [0]>} : vector<4x8x16xf32>, vector<4x8x16xf32>, vector<4x16x16xf32> -> vector<4x16x16xf32>
    "tpu.trace_stop"() : () -> ()
    %cst_12 = arith.constant dense<0xFF800000> : vector<4x16xf32>
    %9 = vector.multi_reduction <maximumf>, %8, %cst_12 [1] : vector<4x16x16xf32> to vector<4x16xf32>
    %10 = vector.shape_cast %9 : vector<4x16xf32> to vector<4x1x16xf32>
    %11 = vector.broadcast %10 : vector<4x1x16xf32> to vector<4x16x16xf32>
    %12 = arith.subf %8, %11 : vector<4x16x16xf32>
    %13 = math.exp %12 : vector<4x16x16xf32>
    %cst_13 = arith.constant dense<0.000000e+00> : vector<4x16xf32>
    %14 = vector.multi_reduction <add>, %13, %cst_13 [1] : vector<4x16x16xf32> to vector<4x16xf32>
    %15 = vector.shape_cast %14 : vector<4x16xf32> to vector<4x1x16xf32>
    "tpu.trace_start"() <{level = 10 : i32, message = "hcs,hst->hct"}> : () -> ()
    %cst_14 = arith.constant dense<0.000000e+00> : vector<4x8x16xf32>
    %16 = tpu.matmul %5, %13, %cst_14 {dimension_numbers = #tpu.dot_dimension_numbers<[2], [1], [1], [2], [0, 0, 0, 1, 1, 2], [0], [0]>} : vector<4x8x16xf32>, vector<4x16x16xf32>, vector<4x8x16xf32> -> vector<4x8x16xf32>
    "tpu.trace_stop"() : () -> ()
    %17 = tpu.reciprocal %15 : vector<4x1x16xf32> -> vector<4x1x16xf32>
    %18 = vector.broadcast %17 : vector<4x1x16xf32> to vector<4x8x16xf32>
    %19 = arith.mulf %16, %18 : vector<4x8x16xf32>
    %c0_15 = arith.constant 0 : index
    %c0_16 = arith.constant 0 : index
    %c0_17 = arith.constant 0 : index
    %20 = vector.load %arg6[%c0_15, %c0_16, %c0_17] : memref<4x8x16xf32, #tpu.memory_space<vmem>>, vector<4x8x16xf32>
    tpu.vector_store %arg6[%c0_15, %c0_16, %c0_17], %19 {strides = array<i32>} : memref<4x8x16xf32, #tpu.memory_space<vmem>>, vector<4x8x16xf32>,
    return
  }
  func.func @transform_0(%arg0: i32, %arg1: i32, %arg2: i32) -> (i32, i32, i32, i32) {
    %c0_i32 = arith.constant 0 : i32
    %c0_i32_0 = arith.constant 0 : i32
    %c0_i32_1 = arith.constant 0 : i32
    return %arg0, %c0_i32, %c0_i32_0, %arg1 : i32, i32, i32, i32
  }
  func.func @transform_1(%arg0: i32, %arg1: i32, %arg2: i32) -> (i32, i32, i32, i32) {
    %c1_i32 = arith.constant 1 : i32
    %c0_i32 = arith.constant 0 : i32
    %c0_i32_0 = arith.constant 0 : i32
    return %arg0, %c1_i32, %c0_i32, %arg2 : i32, i32, i32, i32
  }
  func.func @transform_2(%arg0: i32, %arg1: i32, %arg2: i32) -> (i32, i32, i32, i32) {
    %c2_i32 = arith.constant 2 : i32
    %c0_i32 = arith.constant 0 : i32
    %c0_i32_0 = arith.constant 0 : i32
    return %arg0, %c2_i32, %c0_i32, %arg2 : i32, i32, i32, i32
  }
  func.func @transform_3(%arg0: i32, %arg1: i32, %arg2: i32) -> (i32, i32, i32) {
    %c0_i32 = arith.constant 0 : i32
    %c0_i32_0 = arith.constant 0 : i32
    return %arg0, %c0_i32, %arg1 : i32, i32, i32
  }
}

</mosaic_0001>

<llo_original>
// kernel: tpu_custom_call.1
$region0: #{tpu_custom_call.1}
  #allocation0 [shape = 'u32[]', space=smem, size = 0x4, offset = 0x4, fixed_abs, tag = 'smem constant byte address 0x4 - core index']
  #allocation1 [shape = 'u32[144,128]{1,0:T(1,128)}', space=vmem, size = 0x12000, scoped, tag = 'internal scratch']
  %s0 = inlined_call_operand.hbm [shape: f32[4,3,8,16], index: 0, kind: input, shape index: {}]
  %s1 = inlined_call_operand.hbm [shape: f32[4,3,8,16], index: 1, kind: input, shape index: {}]
  %s2 = inlined_call_operand.hbm [shape: f32[4,3,8,16], index: 2, kind: input, shape index: {}]
  %s3 = inlined_call_operand.hbm [shape: f32[4,8,16], index: 3, kind: output, shape index: {}]
  %s4 = sld [smem:[#allocation0]]
  $region34: #{tpu_custom_call.1} parent=0
    _
  %s6 = ssub.s32 1, %s4
  %s7 = scalar_select 0, %s6, %s4
  $region1: #{tpu_custom_call.1} parent=0
    #allocation2 [shape = 'u8[16384]{0}', space=vmem, size = 0x4000, scoped, tag = 'input window, operand 0, single buffered']
    #allocation3 [shape = 's32[1]{0}', space=sflag, size = 0x4, scoped, tag = 'scoped memory for tpu_custom_call.1']
    #allocation4 [shape = 's32[1]{0}', space=sflag, size = 0x4, scoped, tag = 'scoped memory for tpu_custom_call.1']
    #allocation5 [shape = 'u8[16384]{0}', space=vmem, size = 0x4000, scoped, tag = 'input window, operand 1, single buffered']
    #allocation6 [shape = 's32[1]{0}', space=sflag, size = 0x4, scoped, tag = 'scoped memory for tpu_custom_call.1']
    #allocation7 [shape = 'u8[16384]{0}', space=vmem, size = 0x4000, scoped, tag = 'input window, operand 2, single buffered']
    #allocation8 [shape = 'u8[16384]{0}', space=vmem, size = 0x4000, scoped, tag = 'output window, operand 0, single buffered']
    %8 = vsyncpa [#allocation3], 0
    %9 = vsyncpa [#allocation6], 0
    %10 = vsyncpa [#allocation4], 0
    // Predicated region
    $region2: #{tpu_custom_call.1} parent=1 // pred_check
      _
    $region3: #{tpu_custom_call.1} parent=1 // pred_check_branch
      %12 = sbr.rel (0) target = $region5
    $region4: #{tpu_custom_call.1} parent=1 // pred_region
      %s14 = ssub.s32 512, 512
      %15 = vsyncadd [#allocation3], %s14
      %s16 = sshll.u32 [#allocation2], 4
      %s17 = int_to_ptr.vmem [resolvable:$true] %s16
      %22 = dma.hbm_to_vmem [thread:$0]  %s0, 512, %s17, [#allocation3], 384, 128, 8
    $region5: #{tpu_custom_call.1} parent=1 // pred_fallthru
      _
    // Predicated region
    $region6: #{tpu_custom_call.1} parent=1 // pred_check
      _
    $region7: #{tpu_custom_call.1} parent=1 // pred_check_branch
      %24 = sbr.rel (0) target = $region9
    $region8: #{tpu_custom_call.1} parent=1 // pred_region
      %s26 = ssub.s32 512, 512
      %27 = vsyncadd [#allocation6], %s26
      %s28 = scalar_lea.hbm %s1, 128
      %s29 = sshll.u32 [#allocation5], 4
      %s30 = int_to_ptr.vmem [resolvable:$true] %s29
      %35 = dma.hbm_to_vmem [thread:$0]  %s28, 512, %s30, [#allocation6], 384, 128, 8
    $region9: #{tpu_custom_call.1} parent=1 // pred_fallthru
      _
    // Predicated region
    $region10: #{tpu_custom_call.1} parent=1 // pred_check
      _
    $region11: #{tpu_custom_call.1} parent=1 // pred_check_branch
      %37 = sbr.rel (0) target = $region13
    $region12: #{tpu_custom_call.1} parent=1 // pred_region
      %s39 = ssub.s32 512, 512
      %40 = vsyncadd [#allocation6], %s39
      %s41 = scalar_lea.hbm %s2, 256
      %s42 = sshll.u32 [#allocation7], 4
      %s43 = int_to_ptr.vmem [resolvable:$true] %s42
      %48 = dma.hbm_to_vmem [thread:$0]  %s41, 512, %s43, [#allocation6], 384, 128, 8
    $region13: #{tpu_custom_call.1} parent=1 // pred_fallthru
      _
    // Predicated region
    $region14: #{tpu_custom_call.1} parent=1 // pred_check
      _
    $region15: #{tpu_custom_call.1} parent=1 // pred_check_branch
      %50 = sbr.rel (0) target = $region17
    $region16: #{tpu_custom_call.1} parent=1 // pred_region
      %51 = dma.done [#allocation3], 512
    $region17: #{tpu_custom_call.1} parent=1 // pred_fallthru
      _
    // Predicated region
    $region18: #{tpu_custom_call.1} parent=1 // pred_check
      _
    $region19: #{tpu_custom_call.1} parent=1 // pred_check_branch
      %53 = sbr.rel (0) target = $region21
    $region20: #{tpu_custom_call.1} parent=1 // pred_region
      %54 = dma.done [#allocation6], 512
    $region21: #{tpu_custom_call.1} parent=1 // pred_fallthru
      _
    // Predicated region
    $region22: #{tpu_custom_call.1} parent=1 // pred_check
      _
    $region23: #{tpu_custom_call.1} parent=1 // pred_check_branch
      %56 = sbr.rel (0) target = $region25
    $region24: #{tpu_custom_call.1} parent=1 // pred_region
      %57 = dma.done [#allocation6], 512
    $region25: #{tpu_custom_call.1} parent=1 // pred_fallthru
      _
    %v58 = vld [vmem:[#allocation2] sm:$0xff]
    %v59 = vld [vmem:[#allocation2 + $0x8] sm:$0xff]
    %v60 = vld [vmem:[#allocation2 + $0x10] sm:$0xff]
    %v61 = vld [vmem:[#allocation2 + $0x18] sm:$0xff]
    %v62 = vld [vmem:[#allocation5] sm:$0xff]
    %v63 = vld [vmem:[#allocation5 + $0x8] sm:$0xff]
    %v64 = vld [vmem:[#allocation5 + $0x10] sm:$0xff]
    %v65 = vld [vmem:[#allocation5 + $0x18] sm:$0xff]
    %v66 = vld [vmem:[#allocation7] sm:$0xff]
    %v67 = vld [vmem:[#allocation7 + $0x8] sm:$0xff]
    %v68 = vld [vmem:[#allocation7 + $0x10] sm:$0xff]
    %v69 = vld [vmem:[#allocation7 + $0x18] sm:$0xff]
    %v70 = vmul.f32 %v58, 0.35355338
    %v71 = vmul.f32 %v59, 0.35355338
    %v72 = vmul.f32 %v60, 0.35355338
    %v73 = vmul.f32 %v61, 0.35355338
    %74 = vxpose.xlu0.b32.start [1/16] %v62, 128
    %75 = vxpose.xlu0.b32.cont [2/16] 0.0, 128
    %76 = vxpose.xlu0.b32.cont [3/16] 0.0, 128
    %77 = vxpose.xlu0.b32.cont [4/16] 0.0, 128
    %78 = vxpose.xlu0.b32.cont [5/16] 0.0, 128
    %79 = vxpose.xlu0.b32.cont [6/16] 0.0, 128
    %80 = vxpose.xlu0.b32.cont [7/16] 0.0, 128
    %81 = vxpose.xlu0.b32.cont [8/16] 0.0, 128
    %82 = vxpose.xlu0.b32.cont [9/16] 0.0, 128
    %83 = vxpose.xlu0.b32.cont [10/16] 0.0, 128
    %84 = vxpose.xlu0.b32.cont [11/16] 0.0, 128
    %85 = vxpose.xlu0.b32.cont [12/16] 0.0, 128
    %86 = vxpose.xlu0.b32.cont [13/16] 0.0, 128
    %87 = vxpose.xlu0.b32.cont [14/16] 0.0, 128
    %88 = vxpose.xlu0.b32.cont [15/16] 0.0, 128
    %89 = vxpose.xlu0.b32.end [16/16] 0.0, 128
    %v90 = vpop.trf.xlu0
    %v91 = vpop.trf.xlu0
    %v92 = vpop.trf.xlu0
    %v93 = vpop.trf.xlu0
    %v94 = vpop.trf.xlu0
    %v95 = vpop.trf.xlu0
    %v96 = vpop.trf.xlu0
    %v97 = vpop.trf.xlu0
    %v98 = vpop.trf.xlu0
    %v99 = vpop.trf.xlu0
    %v100 = vpop.trf.xlu0
    %v101 = vpop.trf.xlu0
    %v102 = vpop.trf.xlu0
    %v103 = vpop.trf.xlu0
    %v104 = vpop.trf.xlu0
    %v105 = vpop.trf.xlu0
    %vm106 = vcmask 64512
    %v108 = vsel %vm106, %v90, 0
    %v111 = vsel %vm106, %v91, 0
    %113 = vmatprep.subr.mxu0 0.0
    %114 = vmatpush1.msra.mxu0 %v70
    %115 = vmatprep.subr.mxu0 0.0
    %116 = vmatpush1.msra.mxu0 0.0
    %117 = vmatprep.subr.mxu0 0.0
    %118 = vmatpush1.msra.mxu0 0.0
    %119 = vmatprep.subr.mxu0 0.0
    %120 = vmatpush1.msra.mxu0 0.0
    %121 = vmatprep.subr.mxu0 0.0
    %122 = vmatpush1.msra.mxu0 0.0
    %123 = vmatprep.subr.mxu0 0.0
    %124 = vmatpush1.msra.mxu0 0.0
    %125 = vmatprep.subr.mxu0 0.0
    %126 = vmatpush1.msra.mxu0 0.0
    %127 = vmatprep.subr.mxu0 0.0
    %128 = vmatpush1.msra.mxu0 0.0
    %129 = vmatprep.subr.mxu0 0.0
    %130 = vmatpush1.msra.mxu0 0.0
    %131 = vmatprep.subr.mxu0 0.0
    %132 = vmatpush1.msra.mxu0 0.0
    %133 = vmatprep.subr.mxu0 0.0
    %134 = vmatpush1.msra.mxu0 0.0
    %135 = vmatprep.subr.mxu0 0.0
    %136 = vmatpush1.msra.mxu0 0.0
    %137 = vmatprep.subr.mxu0 0.0
    %138 = vmatpush1.msra.mxu0 0.0
    %139 = vmatprep.subr.mxu0 0.0
    %140 = vmatpush1.msra.mxu0 0.0
    %141 = vmatprep.subr.mxu0 0.0
    %142 = vmatpush1.msra.mxu0 0.0
    %143 = vmatprep.subr.mxu0 0.0
    %144 = vmatpush1.msra.mxu0 0.0
    %145 = vmatprep.subr.mxu0 0.0
    %146 = vmatpush1.msra.mxu0 0.0
    %147 = vmatprep.subr.mxu0 0.0
    %148 = vmatpush1.msra.mxu0 0.0
    %149 = vmatprep.subr.mxu0 0.0
    %150 = vmatpush1.msra.mxu0 0.0
    %151 = vmatprep.subr.mxu0 0.0
    %152 = vmatpush1.msra.mxu0 0.0
    %153 = vmatprep.subr.mxu0 0.0
    %154 = vmatpush1.msra.mxu0 0.0
    %155 = vmatprep.subr.mxu0 0.0
    %156 = vmatpush1.msra.mxu0 0.0
    %157 = vmatprep.subr.mxu0 0.0
    %158 = vmatpush1.msra.mxu0 0.0
    %159 = vmatprep.subr.mxu0 0.0
    %160 = vmatpush1.msra.mxu0 0.0
    %161 = vmatprep.subr.mxu0 0.0
    %162 = vmatpush1.msra.mxu0 0.0
    %163 = vmatprep.subr.mxu0 0.0
    %164 = vmatpush1.msra.mxu0 0.0
    %165 = vmatprep.subr.mxu0 0.0
    %166 = vmatpush1.msra.mxu0 0.0
    %167 = vmatprep.subr.mxu0 0.0
    %168 = vmatpush1.msra.mxu0 0.0
    %169 = vmatprep.subr.mxu0 0.0
    %170 = vmatpush1.msra.mxu0 0.0
    %171 = vmatprep.subr.mxu0 0.0
    %172 = vmatpush1.msra.mxu0 0.0
    %173 = vmatprep.subr.mxu0 0.0
    %174 = vmatpush1.msra.mxu0 0.0
    %175 = vmatprep.subr.mxu0 0.0
    %176 = vmatpush1.msra.mxu0 0.0
    %177 = vmatprep.mubr.f32.mxu0 0.0
    %178 = vmatmul.mubr.f32.gmra.mrb[0].mxu0 %v108
    %v179 = vpop.f32.mrb[0].mxu0
    %v180 = vadd.f32 0.0, %v179
    %v181 = vpop.f32.mrb[0].mxu0
    %182 = vmatprep.mubr.f32.mxu0 0.0
    %183 = vmatmul.mubr.f32.gmra.mrb[0].mxu0 %v111
    %v184 = vpop.f32.mrb[0].mxu0
    %v185 = vadd.f32 0.0, %v184
    %v186 = vpop.f32.mrb[0].mxu0
    %187 = vdwg.mxu0
    %188 = vxpose.xlu0.b32.start [1/16] %v63, 128
    %189 = vxpose.xlu0.b32.cont [2/16] 0.0, 128
    %190 = vxpose.xlu0.b32.cont [3/16] 0.0, 128
    %191 = vxpose.xlu0.b32.cont [4/16] 0.0, 128
    %192 = vxpose.xlu0.b32.cont [5/16] 0.0, 128
    %193 = vxpose.xlu0.b32.cont [6/16] 0.0, 128
    %194 = vxpose.xlu0.b32.cont [7/16] 0.0, 128
    %195 = vxpose.xlu0.b32.cont [8/16] 0.0, 128
    %196 = vxpose.xlu0.b32.cont [9/16] 0.0, 128
    %197 = vxpose.xlu0.b32.cont [10/16] 0.0, 128
    %198 = vxpose.xlu0.b32.cont [11/16] 0.0, 128
    %199 = vxpose.xlu0.b32.cont [12/16] 0.0, 128
    %200 = vxpose.xlu0.b32.cont [13/16] 0.0, 128
    %201 = vxpose.xlu0.b32.cont [14/16] 0.0, 128
    %202 = vxpose.xlu0.b32.cont [15/16] 0.0, 128
    %203 = vxpose.xlu0.b32.end [16/16] 0.0, 128
    %v204 = vpop.trf.xlu0
    %v205 = vpop.trf.xlu0
    %v206 = vpop.trf.xlu0
    %v207 = vpop.trf.xlu0
    %v208 = vpop.trf.xlu0
    %v209 = vpop.trf.xlu0
    %v210 = vpop.trf.xlu0
    %v211 = vpop.trf.xlu0
    %v212 = vpop.trf.xlu0
    %v213 = vpop.trf.xlu0
    %v214 = vpop.trf.xlu0
    %v215 = vpop.trf.xlu0
    %v216 = vpop.trf.xlu0
    %v217 = vpop.trf.xlu0
    %v218 = vpop.trf.xlu0
    %v219 = vpop.trf.xlu0
    %v221 = vsel %vm106, %v204, 0
    %v224 = vsel %vm106, %v205, 0
    %226 = vmatprep.subr.mxu0 0.0
    %227 = vmatpush1.msra.mxu0 %v71
    %228 = vmatprep.subr.mxu0 0.0
    %229 = vmatpush1.msra.mxu0 0.0
    %230 = vmatprep.subr.mxu0 0.0
    %231 = vmatpush1.msra.mxu0 0.0
    %232 = vmatprep.subr.mxu0 0.0
    %233 = vmatpush1.msra.mxu0 0.0
    %234 = vmatprep.subr.mxu0 0.0
    %235 = vmatpush1.msra.mxu0 0.0
    %236 = vmatprep.subr.mxu0 0.0
    %237 = vmatpush1.msra.mxu0 0.0
    %238 = vmatprep.subr.mxu0 0.0
    %239 = vmatpush1.msra.mxu0 0.0
    %240 = vmatprep.subr.mxu0 0.0
    %241 = vmatpush1.msra.mxu0 0.0
    %242 = vmatprep.subr.mxu0 0.0
    %243 = vmatpush1.msra.mxu0 0.0
    %244 = vmatprep.subr.mxu0 0.0
    %245 = vmatpush1.msra.mxu0 0.0
    %246 = vmatprep.subr.mxu0 0.0
    %247 = vmatpush1.msra.mxu0 0.0
    %248 = vmatprep.subr.mxu0 0.0
    %249 = vmatpush1.msra.mxu0 0.0
    %250 = vmatprep.subr.mxu0 0.0
    %251 = vmatpush1.msra.mxu0 0.0
    %252 = vmatprep.subr.mxu0 0.0
    %253 = vmatpush1.msra.mxu0 0.0
    %254 = vmatprep.subr.mxu0 0.0
    %255 = vmatpush1.msra.mxu0 0.0
    %256 = vmatprep.subr.mxu0 0.0
    %257 = vmatpush1.msra.mxu0 0.0
    %258 = vmatprep.subr.mxu0 0.0
    %259 = vmatpush1.msra.mxu0 0.0
    %260 = vmatprep.subr.mxu0 0.0
    %261 = vmatpush1.msra.mxu0 0.0
    %262 = vmatprep.subr.mxu0 0.0
    %263 = vmatpush1.msra.mxu0 0.0
    %264 = vmatprep.subr.mxu0 0.0
    %265 = vmatpush1.msra.mxu0 0.0
    %266 = vmatprep.subr.mxu0 0.0
    %267 = vmatpush1.msra.mxu0 0.0
    %268 = vmatprep.subr.mxu0 0.0
    %269 = vmatpush1.msra.mxu0 0.0
    %270 = vmatprep.subr.mxu0 0.0
    %271 = vmatpush1.msra.mxu0 0.0
    %272 = vmatprep.subr.mxu0 0.0
    %273 = vmatpush1.msra.mxu0 0.0
    %274 = vmatprep.subr.mxu0 0.0
    %275 = vmatpush1.msra.mxu0 0.0
    %276 = vmatprep.subr.mxu0 0.0
    %277 = vmatpush1.msra.mxu0 0.0
    %278 = vmatprep.subr.mxu0 0.0
    %279 = vmatpush1.msra.mxu0 0.0
    %280 = vmatprep.subr.mxu0 0.0
    %281 = vmatpush1.msra.mxu0 0.0
    %282 = vmatprep.subr.mxu0 0.0
    %283 = vmatpush1.msra.mxu0 0.0
    %284 = vmatprep.subr.mxu0 0.0
    %285 = vmatpush1.msra.mxu0 0.0
    %286 = vmatprep.subr.mxu0 0.0
    %287 = vmatpush1.msra.mxu0 0.0
    %288 = vmatprep.subr.mxu0 0.0
    %289 = vmatpush1.msra.mxu0 0.0
    %290 = vmatprep.mubr.f32.mxu0 0.0
    %291 = vmatmul.mubr.f32.gmra.mrb[0].mxu0 %v221
    %v292 = vpop.f32.mrb[0].mxu0
    %v293 = vadd.f32 0.0, %v292
    %v294 = vpop.f32.mrb[0].mxu0
    %295 = vmatprep.mubr.f32.mxu0 0.0
    %296 = vmatmul.mubr.f32.gmra.mrb[0].mxu0 %v224
    %v297 = vpop.f32.mrb[0].mxu0
    %v298 = vadd.f32 0.0, %v297
    %v299 = vpop.f32.mrb[0].mxu0
    %300 = vdwg.mxu0
    %301 = vxpose.xlu0.b32.start [1/16] %v64, 128
    %302 = vxpose.xlu0.b32.cont [2/16] 0.0, 128
    %303 = vxpose.xlu0.b32.cont [3/16] 0.0, 128
    %304 = vxpose.xlu0.b32.cont [4/16] 0.0, 128
    %305 = vxpose.xlu0.b32.cont [5/16] 0.0, 128
    %306 = vxpose.xlu0.b32.cont [6/16] 0.0, 128
    %307 = vxpose.xlu0.b32.cont [7/16] 0.0, 128
    %308 = vxpose.xlu0.b32.cont [8/16] 0.0, 128
    %309 = vxpose.xlu0.b32.cont [9/16] 0.0, 128
    %310 = vxpose.xlu0.b32.cont [10/16] 0.0, 128
    %311 = vxpose.xlu0.b32.cont [11/16] 0.0, 128
    %312 = vxpose.xlu0.b32.cont [12/16] 0.0, 128
    %313 = vxpose.xlu0.b32.cont [13/16] 0.0, 128
    %314 = vxpose.xlu0.b32.cont [14/16] 0.0, 128
    %315 = vxpose.xlu0.b32.cont [15/16] 0.0, 128
    %316 = vxpose.xlu0.b32.end [16/16] 0.0, 128
    %v317 = vpop.trf.xlu0
    %v318 = vpop.trf.xlu0
    %v319 = vpop.trf.xlu0
    %v320 = vpop.trf.xlu0
    %v321 = vpop.trf.xlu0
    %v322 = vpop.trf.xlu0
    %v323 = vpop.trf.xlu0
    %v324 = vpop.trf.xlu0
    %v325 = vpop.trf.xlu0
    %v326 = vpop.trf.xlu0
    %v327 = vpop.trf.xlu0
    %v328 = vpop.trf.xlu0
    %v329 = vpop.trf.xlu0
    %v330 = vpop.trf.xlu0
    %v331 = vpop.trf.xlu0
    %v332 = vpop.trf.xlu0
    %v334 = vsel %vm106, %v317, 0
    %v337 = vsel %vm106, %v318, 0
    %339 = vmatprep.subr.mxu0 0.0
    %340 = vmatpush1.msra.mxu0 %v72
    %341 = vmatprep.subr.mxu0 0.0
    %342 = vmatpush1.msra.mxu0 0.0
    %343 = vmatprep.subr.mxu0 0.0
    %344 = vmatpush1.msra.mxu0 0.0
    %345 = vmatprep.subr.mxu0 0.0
    %346 = vmatpush1.msra.mxu0 0.0
    %347 = vmatprep.subr.mxu0 0.0
    %348 = vmatpush1.msra.mxu0 0.0
    %349 = vmatprep.subr.mxu0 0.0
    %350 = vmatpush1.msra.mxu0 0.0
    %351 = vmatprep.subr.mxu0 0.0
    %352 = vmatpush1.msra.mxu0 0.0
    %353 = vmatprep.subr.mxu0 0.0
    %354 = vmatpush1.msra.mxu0 0.0
    %355 = vmatprep.subr.mxu0 0.0
    %356 = vmatpush1.msra.mxu0 0.0
    %357 = vmatprep.subr.mxu0 0.0
    %358 = vmatpush1.msra.mxu0 0.0
    %359 = vmatprep.subr.mxu0 0.0
    %360 = vmatpush1.msra.mxu0 0.0
    %361 = vmatprep.subr.mxu0 0.0
    %362 = vmatpush1.msra.mxu0 0.0
    %363 = vmatprep.subr.mxu0 0.0
    %364 = vmatpush1.msra.mxu0 0.0
    %365 = vmatprep.subr.mxu0 0.0
    %366 = vmatpush1.msra.mxu0 0.0
    %367 = vmatprep.subr.mxu0 0.0
    %368 = vmatpush1.msra.mxu0 0.0
    %369 = vmatprep.subr.mxu0 0.0
    %370 = vmatpush1.msra.mxu0 0.0
    %371 = vmatprep.subr.mxu0 0.0
    %372 = vmatpush1.msra.mxu0 0.0
    %373 = vmatprep.subr.mxu0 0.0
    %374 = vmatpush1.msra.mxu0 0.0
    %375 = vmatprep.subr.mxu0 0.0
    %376 = vmatpush1.msra.mxu0 0.0
    %377 = vmatprep.subr.mxu0 0.0
    %378 = vmatpush1.msra.mxu0 0.0
    %379 = vmatprep.subr.mxu0 0.0
    %380 = vmatpush1.msra.mxu0 0.0
    %381 = vmatprep.subr.mxu0 0.0
    %382 = vmatpush1.msra.mxu0 0.0
    %383 = vmatprep.subr.mxu0 0.0
    %384 = vmatpush1.msra.mxu0 0.0
    %385 = vmatprep.subr.mxu0 0.0
    %386 = vmatpush1.msra.mxu0 0.0
    %387 = vmatprep.subr.mxu0 0.0
    %388 = vmatpush1.msra.mxu0 0.0
    %389 = vmatprep.subr.mxu0 0.0
    %390 = vmatpush1.msra.mxu0 0.0
    %391 = vmatprep.subr.mxu0 0.0
    %392 = vmatpush1.msra.mxu0 0.0
    %393 = vmatprep.subr.mxu0 0.0
    %394 = vmatpush1.msra.mxu0 0.0
    %395 = vmatprep.subr.mxu0 0.0
    %396 = vmatpush1.msra.mxu0 0.0
    %397 = vmatprep.subr.mxu0 0.0
    %398 = vmatpush1.msra.mxu0 0.0
    %399 = vmatprep.subr.mxu0 0.0
    %400 = vmatpush1.msra.mxu0 0.0
    %401 = vmatprep.subr.mxu0 0.0
    %402 = vmatpush1.msra.mxu0 0.0
    %403 = vmatprep.mubr.f32.mxu0 0.0
    %404 = vmatmul.mubr.f32.gmra.mrb[0].mxu0 %v334
    %v405 = vpop.f32.mrb[0].mxu0
    %v406 = vadd.f32 0.0, %v405
    %v407 = vpop.f32.mrb[0].mxu0
    %408 = vmatprep.mubr.f32.mxu0 0.0
    %409 = vmatmul.mubr.f32.gmra.mrb[0].mxu0 %v337
    %v410 = vpop.f32.mrb[0].mxu0
    %v411 = vadd.f32 0.0, %v410
    %v412 = vpop.f32.mrb[0].mxu0
    %413 = vdwg.mxu0
    %414 = vxpose.xlu0.b32.start [1/16] %v65, 128
    %415 = vxpose.xlu0.b32.cont [2/16] 0.0, 128
    %416 = vxpose.xlu0.b32.cont [3/16] 0.0, 128
    %417 = vxpose.xlu0.b32.cont [4/16] 0.0, 128
    %418 = vxpose.xlu0.b32.cont [5/16] 0.0, 128
    %419 = vxpose.xlu0.b32.cont [6/16] 0.0, 128
    %420 = vxpose.xlu0.b32.cont [7/16] 0.0, 128
    %421 = vxpose.xlu0.b32.cont [8/16] 0.0, 128
    %422 = vxpose.xlu0.b32.cont [9/16] 0.0, 128
    %423 = vxpose.xlu0.b32.cont [10/16] 0.0, 128
    %424 = vxpose.xlu0.b32.cont [11/16] 0.0, 128
    %425 = vxpose.xlu0.b32.cont [12/16] 0.0, 128
    %426 = vxpose.xlu0.b32.cont [13/16] 0.0, 128
    %427 = vxpose.xlu0.b32.cont [14/16] 0.0, 128
    %428 = vxpose.xlu0.b32.cont [15/16] 0.0, 128
    %429 = vxpose.xlu0.b32.end [16/16] 0.0, 128
    %v430 = vpop.trf.xlu0
    %v431 = vpop.trf.xlu0
    %v432 = vpop.trf.xlu0
    %v433 = vpop.trf.xlu0
    %v434 = vpop.trf.xlu0
    %v435 = vpop.trf.xlu0
    %v436 = vpop.trf.xlu0
    %v437 = vpop.trf.xlu0
    %v438 = vpop.trf.xlu0
    %v439 = vpop.trf.xlu0
    %v440 = vpop.trf.xlu0
    %v441 = vpop.trf.xlu0
    %v442 = vpop.trf.xlu0
    %v443 = vpop.trf.xlu0
    %v444 = vpop.trf.xlu0
    %v445 = vpop.trf.xlu0
    %v447 = vsel %vm106, %v430, 0
    %v450 = vsel %vm106, %v431, 0
    %452 = vmatprep.subr.mxu0 0.0
    %453 = vmatpush1.msra.mxu0 %v73
    %454 = vmatprep.subr.mxu0 0.0
    %455 = vmatpush1.msra.mxu0 0.0
    %456 = vmatprep.subr.mxu0 0.0
    %457 = vmatpush1.msra.mxu0 0.0
    %458 = vmatprep.subr.mxu0 0.0
    %459 = vmatpush1.msra.mxu0 0.0
    %460 = vmatprep.subr.mxu0 0.0
    %461 = vmatpush1.msra.mxu0 0.0
    %462 = vmatprep.subr.mxu0 0.0
    %463 = vmatpush1.msra.mxu0 0.0
    %464 = vmatprep.subr.mxu0 0.0
    %465 = vmatpush1.msra.mxu0 0.0
    %466 = vmatprep.subr.mxu0 0.0
    %467 = vmatpush1.msra.mxu0 0.0
    %468 = vmatprep.subr.mxu0 0.0
    %469 = vmatpush1.msra.mxu0 0.0
    %470 = vmatprep.subr.mxu0 0.0
    %471 = vmatpush1.msra.mxu0 0.0
    %472 = vmatprep.subr.mxu0 0.0
    %473 = vmatpush1.msra.mxu0 0.0
    %474 = vmatprep.subr.mxu0 0.0
    %475 = vmatpush1.msra.mxu0 0.0
    %476 = vmatprep.subr.mxu0 0.0
    %477 = vmatpush1.msra.mxu0 0.0
    %478 = vmatprep.subr.mxu0 0.0
    %479 = vmatpush1.msra.mxu0 0.0
    %480 = vmatprep.subr.mxu0 0.0
    %481 = vmatpush1.msra.mxu0 0.0
    %482 = vmatprep.subr.mxu0 0.0
    %483 = vmatpush1.msra.mxu0 0.0
    %484 = vmatprep.subr.mxu0 0.0
    %485 = vmatpush1.msra.mxu0 0.0
    %486 = vmatprep.subr.mxu0 0.0
    %487 = vmatpush1.msra.mxu0 0.0
    %488 = vmatprep.subr.mxu0 0.0
    %489 = vmatpush1.msra.mxu0 0.0
    %490 = vmatprep.subr.mxu0 0.0
    %491 = vmatpush1.msra.mxu0 0.0
    %492 = vmatprep.subr.mxu0 0.0
    %493 = vmatpush1.msra.mxu0 0.0
    %494 = vmatprep.subr.mxu0 0.0
    %495 = vmatpush1.msra.mxu0 0.0
    %496 = vmatprep.subr.mxu0 0.0
    %497 = vmatpush1.msra.mxu0 0.0
    %498 = vmatprep.subr.mxu0 0.0
    %499 = vmatpush1.msra.mxu0 0.0
    %500 = vmatprep.subr.mxu0 0.0
    %501 = vmatpush1.msra.mxu0 0.0
    %502 = vmatprep.subr.mxu0 0.0
    %503 = vmatpush1.msra.mxu0 0.0
    %504 = vmatprep.subr.mxu0 0.0
    %505 = vmatpush1.msra.mxu0 0.0
    %506 = vmatprep.subr.mxu0 0.0
    %507 = vmatpush1.msra.mxu0 0.0
    %508 = vmatprep.subr.mxu0 0.0
    %509 = vmatpush1.msra.mxu0 0.0
    %510 = vmatprep.subr.mxu0 0.0
    %511 = vmatpush1.msra.mxu0 0.0
    %512 = vmatprep.subr.mxu0 0.0
    %513 = vmatpush1.msra.mxu0 0.0
    %514 = vmatprep.subr.mxu0 0.0
    %515 = vmatpush1.msra.mxu0 0.0
    %516 = vmatprep.mubr.f32.mxu0 0.0
    %517 = vmatmul.mubr.f32.gmra.mrb[0].mxu0 %v447
    %v518 = vpop.f32.mrb[0].mxu0
    %v519 = vadd.f32 0.0, %v518
    %v520 = vpop.f32.mrb[0].mxu0
    %521 = vmatprep.mubr.f32.mxu0 0.0
    %522 = vmatmul.mubr.f32.gmra.mrb[0].mxu0 %v450
    %v523 = vpop.f32.mrb[0].mxu0
    %v524 = vadd.f32 0.0, %v523
    %v525 = vpop.f32.mrb[0].mxu0
    %526 = vdwg.mxu0
    %vm527 = vcmask 130048
    %v528 = vsel %vm527, %v180, -inf
    %v529 = vsel %vm527, %v185, -inf
    %v530 = vmax.f32 %v528, %v529
    %v531 = vrot.slane %v530, 4
    %v532 = vmax.f32 %v530, %v531
    %v533 = vrot.slane %v532, 2
    %v534 = vmax.f32 %v532, %v533
    %v535 = vrot.slane %v534, 1
    %v536 = vmax.f32 %v534, %v535
    %v537 = vsel %vm527, %v293, -inf
    %v538 = vsel %vm527, %v298, -inf
    %v539 = vmax.f32 %v537, %v538
    %v540 = vrot.slane %v539, 4
    %v541 = vmax.f32 %v539, %v540
    %v542 = vrot.slane %v541, 2
    %v543 = vmax.f32 %v541, %v542
    %v544 = vrot.slane %v543, 1
    %v545 = vmax.f32 %v543, %v544
    %v546 = vsel %vm527, %v406, -inf
    %v547 = vsel %vm527, %v411, -inf
    %v548 = vmax.f32 %v546, %v547
    %v549 = vrot.slane %v548, 4
    %v550 = vmax.f32 %v548, %v549
    %v551 = vrot.slane %v550, 2
    %v552 = vmax.f32 %v550, %v551
    %v553 = vrot.slane %v552, 1
    %v554 = vmax.f32 %v552, %v553
    %v555 = vsel %vm527, %v519, -inf
    %v556 = vsel %vm527, %v524, -inf
    %v557 = vmax.f32 %v555, %v556
    %v558 = vrot.slane %v557, 4
    %v559 = vmax.f32 %v557, %v558
    %v560 = vrot.slane %v559, 2
    %v561 = vmax.f32 %v559, %v560
    %v562 = vrot.slane %v561, 1
    %v563 = vmax.f32 %v561, %v562
    %v564 = vsub.f32 %v180, %v536
    %v565 = vsub.f32 %v185, %v536
    %v566 = vsub.f32 %v293, %v545
    %v567 = vsub.f32 %v298, %v545
    %v568 = vsub.f32 %v406, %v554
    %v569 = vsub.f32 %v411, %v554
    %v570 = vsub.f32 %v519, %v563
    %v571 = vsub.f32 %v524, %v563
    %v572 = vmul.f32 %v564, 1.442695
    %v573 = vpow.pop %v572
    %v574 = vmul.f32 %v565, 1.442695
    %v575 = vpow.pop %v574
    %v576 = vmul.f32 %v566, 1.442695
    %v577 = vpow.pop %v576
    %v578 = vmul.f32 %v567, 1.442695
    %v579 = vpow.pop %v578
    %v580 = vmul.f32 %v568, 1.442695
    %v581 = vpow.pop %v580
    %v582 = vmul.f32 %v569, 1.442695
    %v583 = vpow.pop %v582
    %v584 = vmul.f32 %v570, 1.442695
    %v585 = vpow.pop %v584
    %v586 = vmul.f32 %v571, 1.442695
    %v587 = vpow.pop %v586
    %v588 = vsel %vm527, %v573, 0.0
    %v589 = vsel %vm527, %v575, 0.0
    %v590 = vadd.f32 %v588, %v589
    %v591 = vrot.slane %v590, 4
    %v592 = vadd.f32 %v590, %v591
    %v593 = vrot.slane %v592, 2
    %v594 = vadd.f32 %v592, %v593
    %v595 = vrot.slane %v594, 1
    %v596 = vadd.f32 %v594, %v595
    %v597 = vsel %vm527, %v577, 0.0
    %v598 = vsel %vm527, %v579, 0.0
    %v599 = vadd.f32 %v597, %v598
    %v600 = vrot.slane %v599, 4
    %v601 = vadd.f32 %v599, %v600
    %v602 = vrot.slane %v601, 2
    %v603 = vadd.f32 %v601, %v602
    %v604 = vrot.slane %v603, 1
    %v605 = vadd.f32 %v603, %v604
    %v606 = vsel %vm527, %v581, 0.0
    %v607 = vsel %vm527, %v583, 0.0
    %v608 = vadd.f32 %v606, %v607
    %v609 = vrot.slane %v608, 4
    %v610 = vadd.f32 %v608, %v609
    %v611 = vrot.slane %v610, 2
    %v612 = vadd.f32 %v610, %v611
    %v613 = vrot.slane %v612, 1
    %v614 = vadd.f32 %v612, %v613
    %v615 = vsel %vm527, %v585, 0.0
    %v616 = vsel %vm527, %v587, 0.0
    %v617 = vadd.f32 %v615, %v616
    %v618 = vrot.slane %v617, 4
    %v619 = vadd.f32 %v617, %v618
    %v620 = vrot.slane %v619, 2
    %v621 = vadd.f32 %v619, %v620
    %v622 = vrot.slane %v621, 1
    %v623 = vadd.f32 %v621, %v622
    %v625 = vsel %vm527, %v66, 0
    %627 = vmatprep.subr.mxu0 0.0
    %628 = vmatpush1.msra.mxu0 %v573
    %629 = vmatprep.subr.mxu0 0.0
    %630 = vmatpush1.msra.mxu0 %v575
    %631 = vmatprep.subr.mxu0 0.0
    %632 = vmatpush1.msra.mxu0 0.0
    %633 = vmatprep.subr.mxu0 0.0
    %634 = vmatpush1.msra.mxu0 0.0
    %635 = vmatprep.subr.mxu0 0.0
    %636 = vmatpush1.msra.mxu0 0.0
    %637 = vmatprep.subr.mxu0 0.0
    %638 = vmatpush1.msra.mxu0 0.0
    %639 = vmatprep.subr.mxu0 0.0
    %640 = vmatpush1.msra.mxu0 0.0
    %641 = vmatprep.subr.mxu0 0.0
    %642 = vmatpush1.msra.mxu0 0.0
    %643 = vmatprep.subr.mxu0 0.0
    %644 = vmatpush1.msra.mxu0 0.0
    %645 = vmatprep.subr.mxu0 0.0
    %646 = vmatpush1.msra.mxu0 0.0
    %647 = vmatprep.subr.mxu0 0.0
    %648 = vmatpush1.msra.mxu0 0.0
    %649 = vmatprep.subr.mxu0 0.0
    %650 = vmatpush1.msra.mxu0 0.0
    %651 = vmatprep.subr.mxu0 0.0
    %652 = vmatpush1.msra.mxu0 0.0
    %653 = vmatprep.subr.mxu0 0.0
    %654 = vmatpush1.msra.mxu0 0.0
    %655 = vmatprep.subr.mxu0 0.0
    %656 = vmatpush1.msra.mxu0 0.0
    %657 = vmatprep.subr.mxu0 0.0
    %658 = vmatpush1.msra.mxu0 0.0
    %659 = vmatprep.subr.mxu0 0.0
    %660 = vmatpush1.msra.mxu0 0.0
    %661 = vmatprep.subr.mxu0 0.0
    %662 = vmatpush1.msra.mxu0 0.0
    %663 = vmatprep.subr.mxu0 0.0
    %664 = vmatpush1.msra.mxu0 0.0
    %665 = vmatprep.subr.mxu0 0.0
    %666 = vmatpush1.msra.mxu0 0.0
    %667 = vmatprep.subr.mxu0 0.0
    %668 = vmatpush1.msra.mxu0 0.0
    %669 = vmatprep.subr.mxu0 0.0
    %670 = vmatpush1.msra.mxu0 0.0
    %671 = vmatprep.subr.mxu0 0.0
    %672 = vmatpush1.msra.mxu0 0.0
    %673 = vmatprep.subr.mxu0 0.0
    %674 = vmatpush1.msra.mxu0 0.0
    %675 = vmatprep.subr.mxu0 0.0
    %676 = vmatpush1.msra.mxu0 0.0
    %677 = vmatprep.subr.mxu0 0.0
    %678 = vmatpush1.msra.mxu0 0.0
    %679 = vmatprep.subr.mxu0 0.0
    %680 = vmatpush1.msra.mxu0 0.0
    %681 = vmatprep.subr.mxu0 0.0
    %682 = vmatpush1.msra.mxu0 0.0
    %683 = vmatprep.subr.mxu0 0.0
    %684 = vmatpush1.msra.mxu0 0.0
    %685 = vmatprep.subr.mxu0 0.0
    %686 = vmatpush1.msra.mxu0 0.0
    %687 = vmatprep.subr.mxu0 0.0
    %688 = vmatpush1.msra.mxu0 0.0
    %689 = vmatprep.subr.mxu0 0.0
    %690 = vmatpush1.msra.mxu0 0.0
    %691 = vmatprep.mubr.f32.mxu0 0.0
    %692 = vmatmul.mubr.f32.gmra.mrb[0].mxu0 %v625
    %v693 = vpop.f32.mrb[0].mxu0
    %v694 = vadd.f32 0.0, %v693
    %v695 = vpop.f32.mrb[0].mxu0
    %696 = vdwg.mxu0
    %v698 = vsel %vm527, %v67, 0
    %700 = vmatprep.subr.mxu0 0.0
    %701 = vmatpush1.msra.mxu0 %v577
    %702 = vmatprep.subr.mxu0 0.0
    %703 = vmatpush1.msra.mxu0 %v579
    %704 = vmatprep.subr.mxu0 0.0
    %705 = vmatpush1.msra.mxu0 0.0
    %706 = vmatprep.subr.mxu0 0.0
    %707 = vmatpush1.msra.mxu0 0.0
    %708 = vmatprep.subr.mxu0 0.0
    %709 = vmatpush1.msra.mxu0 0.0
    %710 = vmatprep.subr.mxu0 0.0
    %711 = vmatpush1.msra.mxu0 0.0
    %712 = vmatprep.subr.mxu0 0.0
    %713 = vmatpush1.msra.mxu0 0.0
    %714 = vmatprep.subr.mxu0 0.0
    %715 = vmatpush1.msra.mxu0 0.0
    %716 = vmatprep.subr.mxu0 0.0
    %717 = vmatpush1.msra.mxu0 0.0
    %718 = vmatprep.subr.mxu0 0.0
    %719 = vmatpush1.msra.mxu0 0.0
    %720 = vmatprep.subr.mxu0 0.0
    %721 = vmatpush1.msra.mxu0 0.0
    %722 = vmatprep.subr.mxu0 0.0
    %723 = vmatpush1.msra.mxu0 0.0
    %724 = vmatprep.subr.mxu0 0.0
    %725 = vmatpush1.msra.mxu0 0.0
    %726 = vmatprep.subr.mxu0 0.0
    %727 = vmatpush1.msra.mxu0 0.0
    %728 = vmatprep.subr.mxu0 0.0
    %729 = vmatpush1.msra.mxu0 0.0
    %730 = vmatprep.subr.mxu0 0.0
    %731 = vmatpush1.msra.mxu0 0.0
    %732 = vmatprep.subr.mxu0 0.0
    %733 = vmatpush1.msra.mxu0 0.0
    %734 = vmatprep.subr.mxu0 0.0
    %735 = vmatpush1.msra.mxu0 0.0
    %736 = vmatprep.subr.mxu0 0.0
    %737 = vmatpush1.msra.mxu0 0.0
    %738 = vmatprep.subr.mxu0 0.0
    %739 = vmatpush1.msra.mxu0 0.0
    %740 = vmatprep.subr.mxu0 0.0
    %741 = vmatpush1.msra.mxu0 0.0
    %742 = vmatprep.subr.mxu0 0.0
    %743 = vmatpush1.msra.mxu0 0.0
    %744 = vmatprep.subr.mxu0 0.0
    %745 = vmatpush1.msra.mxu0 0.0
    %746 = vmatprep.subr.mxu0 0.0
    %747 = vmatpush1.msra.mxu0 0.0
    %748 = vmatprep.subr.mxu0 0.0
    %749 = vmatpush1.msra.mxu0 0.0
    %750 = vmatprep.subr.mxu0 0.0
    %751 = vmatpush1.msra.mxu0 0.0
    %752 = vmatprep.subr.mxu0 0.0
    %753 = vmatpush1.msra.mxu0 0.0
    %754 = vmatprep.subr.mxu0 0.0
    %755 = vmatpush1.msra.mxu0 0.0
    %756 = vmatprep.subr.mxu0 0.0
    %757 = vmatpush1.msra.mxu0 0.0
    %758 = vmatprep.subr.mxu0 0.0
    %759 = vmatpush1.msra.mxu0 0.0
    %760 = vmatprep.subr.mxu0 0.0
    %761 = vmatpush1.msra.mxu0 0.0
    %762 = vmatprep.subr.mxu0 0.0
    %763 = vmatpush1.msra.mxu0 0.0
    %764 = vmatprep.mubr.f32.mxu0 0.0
    %765 = vmatmul.mubr.f32.gmra.mrb[0].mxu0 %v698
    %v766 = vpop.f32.mrb[0].mxu0
    %v767 = vadd.f32 0.0, %v766
    %v768 = vpop.f32.mrb[0].mxu0
    %769 = vdwg.mxu0
    %v771 = vsel %vm527, %v68, 0
    %773 = vmatprep.subr.mxu0 0.0
    %774 = vmatpush1.msra.mxu0 %v581
    %775 = vmatprep.subr.mxu0 0.0
    %776 = vmatpush1.msra.mxu0 %v583
    %777 = vmatprep.subr.mxu0 0.0
    %778 = vmatpush1.msra.mxu0 0.0
    %779 = vmatprep.subr.mxu0 0.0
    %780 = vmatpush1.msra.mxu0 0.0
    %781 = vmatprep.subr.mxu0 0.0
    %782 = vmatpush1.msra.mxu0 0.0
    %783 = vmatprep.subr.mxu0 0.0
    %784 = vmatpush1.msra.mxu0 0.0
    %785 = vmatprep.subr.mxu0 0.0
    %786 = vmatpush1.msra.mxu0 0.0
    %787 = vmatprep.subr.mxu0 0.0
    %788 = vmatpush1.msra.mxu0 0.0
    %789 = vmatprep.subr.mxu0 0.0
    %790 = vmatpush1.msra.mxu0 0.0
    %791 = vmatprep.subr.mxu0 0.0
    %792 = vmatpush1.msra.mxu0 0.0
    %793 = vmatprep.subr.mxu0 0.0
    %794 = vmatpush1.msra.mxu0 0.0
    %795 = vmatprep.subr.mxu0 0.0
    %796 = vmatpush1.msra.mxu0 0.0
    %797 = vmatprep.subr.mxu0 0.0
    %798 = vmatpush1.msra.mxu0 0.0
    %799 = vmatprep.subr.mxu0 0.0
    %800 = vmatpush1.msra.mxu0 0.0
    %801 = vmatprep.subr.mxu0 0.0
    %802 = vmatpush1.msra.mxu0 0.0
    %803 = vmatprep.subr.mxu0 0.0
    %804 = vmatpush1.msra.mxu0 0.0
    %805 = vmatprep.subr.mxu0 0.0
    %806 = vmatpush1.msra.mxu0 0.0
    %807 = vmatprep.subr.mxu0 0.0
    %808 = vmatpush1.msra.mxu0 0.0
    %809 = vmatprep.subr.mxu0 0.0
    %810 = vmatpush1.msra.mxu0 0.0
    %811 = vmatprep.subr.mxu0 0.0
    %812 = vmatpush1.msra.mxu0 0.0
    %813 = vmatprep.subr.mxu0 0.0
    %814 = vmatpush1.msra.mxu0 0.0
    %815 = vmatprep.subr.mxu0 0.0
    %816 = vmatpush1.msra.mxu0 0.0
    %817 = vmatprep.subr.mxu0 0.0
    %818 = vmatpush1.msra.mxu0 0.0
    %819 = vmatprep.subr.mxu0 0.0
    %820 = vmatpush1.msra.mxu0 0.0
    %821 = vmatprep.subr.mxu0 0.0
    %822 = vmatpush1.msra.mxu0 0.0
    %823 = vmatprep.subr.mxu0 0.0
    %824 = vmatpush1.msra.mxu0 0.0
    %825 = vmatprep.subr.mxu0 0.0
    %826 = vmatpush1.msra.mxu0 0.0
    %827 = vmatprep.subr.mxu0 0.0
    %828 = vmatpush1.msra.mxu0 0.0
    %829 = vmatprep.subr.mxu0 0.0
    %830 = vmatpush1.msra.mxu0 0.0
    %831 = vmatprep.subr.mxu0 0.0
    %832 = vmatpush1.msra.mxu0 0.0
    %833 = vmatprep.subr.mxu0 0.0
    %834 = vmatpush1.msra.mxu0 0.0
    %835 = vmatprep.subr.mxu0 0.0
    %836 = vmatpush1.msra.mxu0 0.0
    %837 = vmatprep.mubr.f32.mxu0 0.0
    %838 = vmatmul.mubr.f32.gmra.mrb[0].mxu0 %v771
    %v839 = vpop.f32.mrb[0].mxu0
    %v840 = vadd.f32 0.0, %v839
    %v841 = vpop.f32.mrb[0].mxu0
    %842 = vdwg.mxu0
    %v844 = vsel %vm527, %v69, 0
    %846 = vmatprep.subr.mxu0 0.0
    %847 = vmatpush1.msra.mxu0 %v585
    %848 = vmatprep.subr.mxu0 0.0
    %849 = vmatpush1.msra.mxu0 %v587
    %850 = vmatprep.subr.mxu0 0.0
    %851 = vmatpush1.msra.mxu0 0.0
    %852 = vmatprep.subr.mxu0 0.0
    %853 = vmatpush1.msra.mxu0 0.0
    %854 = vmatprep.subr.mxu0 0.0
    %855 = vmatpush1.msra.mxu0 0.0
    %856 = vmatprep.subr.mxu0 0.0
    %857 = vmatpush1.msra.mxu0 0.0
    %858 = vmatprep.subr.mxu0 0.0
    %859 = vmatpush1.msra.mxu0 0.0
    %860 = vmatprep.subr.mxu0 0.0
    %861 = vmatpush1.msra.mxu0 0.0
    %862 = vmatprep.subr.mxu0 0.0
    %863 = vmatpush1.msra.mxu0 0.0
    %864 = vmatprep.subr.mxu0 0.0
    %865 = vmatpush1.msra.mxu0 0.0
    %866 = vmatprep.subr.mxu0 0.0
    %867 = vmatpush1.msra.mxu0 0.0
    %868 = vmatprep.subr.mxu0 0.0
    %869 = vmatpush1.msra.mxu0 0.0
    %870 = vmatprep.subr.mxu0 0.0
    %871 = vmatpush1.msra.mxu0 0.0
    %872 = vmatprep.subr.mxu0 0.0
    %873 = vmatpush1.msra.mxu0 0.0
    %874 = vmatprep.subr.mxu0 0.0
    %875 = vmatpush1.msra.mxu0 0.0
    %876 = vmatprep.subr.mxu0 0.0
    %877 = vmatpush1.msra.mxu0 0.0
    %878 = vmatprep.subr.mxu0 0.0
    %879 = vmatpush1.msra.mxu0 0.0
    %880 = vmatprep.subr.mxu0 0.0
    %881 = vmatpush1.msra.mxu0 0.0
    %882 = vmatprep.subr.mxu0 0.0
    %883 = vmatpush1.msra.mxu0 0.0
    %884 = vmatprep.subr.mxu0 0.0
    %885 = vmatpush1.msra.mxu0 0.0
    %886 = vmatprep.subr.mxu0 0.0
    %887 = vmatpush1.msra.mxu0 0.0
    %888 = vmatprep.subr.mxu0 0.0
    %889 = vmatpush1.msra.mxu0 0.0
    %890 = vmatprep.subr.mxu0 0.0
    %891 = vmatpush1.msra.mxu0 0.0
    %892 = vmatprep.subr.mxu0 0.0
    %893 = vmatpush1.msra.mxu0 0.0
    %894 = vmatprep.subr.mxu0 0.0
    %895 = vmatpush1.msra.mxu0 0.0
    %896 = vmatprep.subr.mxu0 0.0
    %897 = vmatpush1.msra.mxu0 0.0
    %898 = vmatprep.subr.mxu0 0.0
    %899 = vmatpush1.msra.mxu0 0.0
    %900 = vmatprep.subr.mxu0 0.0
    %901 = vmatpush1.msra.mxu0 0.0
    %902 = vmatprep.subr.mxu0 0.0
    %903 = vmatpush1.msra.mxu0 0.0
    %904 = vmatprep.subr.mxu0 0.0
    %905 = vmatpush1.msra.mxu0 0.0
    %906 = vmatprep.subr.mxu0 0.0
    %907 = vmatpush1.msra.mxu0 0.0
    %908 = vmatprep.subr.mxu0 0.0
    %909 = vmatpush1.msra.mxu0 0.0
    %910 = vmatprep.mubr.f32.mxu0 0.0
    %911 = vmatmul.mubr.f32.gmra.mrb[0].mxu0 %v844
    %v912 = vpop.f32.mrb[0].mxu0
    %v913 = vadd.f32 0.0, %v912
    %v914 = vpop.f32.mrb[0].mxu0
    %915 = vdwg.mxu0
    %v916 = vrcp.pop %v596
    %v917 = vrcp.pop %v605
    %v918 = vrcp.pop %v614
    %v919 = vrcp.pop %v623
    %v920 = vmul.f32 %v694, %v916
    %v921 = vmul.f32 %v767, %v917
    %v922 = vmul.f32 %v840, %v918
    %v923 = vmul.f32 %v913, %v919
    %924 = vst.msk [vmem:[#allocation8] sm:$0xff] %vm527, %v920
    %925 = vst.msk [vmem:[#allocation8 + $0x8] sm:$0xff] %vm527, %v921
    %926 = vst.msk [vmem:[#allocation8 + $0x10] sm:$0xff] %vm527, %v922
    %927 = vst.msk [vmem:[#allocation8 + $0x18] sm:$0xff] %vm527, %v923
    // Predicated region
    $region26: #{tpu_custom_call.1} parent=1 // pred_check
      _
    $region27: #{tpu_custom_call.1} parent=1 // pred_check_branch
      %929 = sbr.rel (0) target = $region29
    $region28: #{tpu_custom_call.1} parent=1 // pred_region
      %s931 = ssub.s32 512, 512
      %932 = vsyncadd [#allocation4], %s931
      %s933 = sshll.u32 [#allocation8], 4
      %s934 = int_to_ptr.vmem [resolvable:$true] %s933
      %939 = dma.vmem_to_hbm [thread:$0]  %s934, 512, %s3, [#allocation4], 128, 128, 8
    $region29: #{tpu_custom_call.1} parent=1 // pred_fallthru
      _
    // Predicated region
    $region30: #{tpu_custom_call.1} parent=1 // pred_check
      _
    $region31: #{tpu_custom_call.1} parent=1 // pred_check_branch
      %941 = sbr.rel (0) target = $region33
    $region32: #{tpu_custom_call.1} parent=1 // pred_region
      %942 = dma.done [#allocation4], 512
    $region33: #{tpu_custom_call.1} parent=1 // pred_fallthru
      _
    %943 = vsyncpa [#allocation3], 1
    %944 = vsyncpa [#allocation6], 1
    %945 = vsyncpa [#allocation4], 1

</llo_original>
